<compile_context>
chip_gen: v6e
topology: v6e:2x2x1
jax: 0.10.0
libtpu: 0.0.40
codegen_flags: <defaults>
</compile_context>

<pallas_src>
import math
from functools import partial

import jax
import jax.numpy as jnp
from jax.experimental import pallas as pl
from jax.experimental.pallas import tpu as pltpu


def _sdpa_kernel(q_ref, k_ref, v_ref, out_ref, attn_ref, *,
                 inv_temperature, compute_dtype):
    # Blocks: q (G, TQ, Dk), k (G, Lk, Dk), v (G, Lk, Dv)
    #         out (G, TQ, Dv), attn (G, TQ, Lk)
    scale = jnp.asarray(inv_temperature, dtype=q_ref.dtype)
    q = (q_ref[...] * scale).astype(compute_dtype)   # fold 1/T into q (O(TQ*Dk))
    k = k_ref[...].astype(compute_dtype)
    v = v_ref[...].astype(compute_dtype)

    # scores = (q / T) @ k^T  -> batched MXU matmul with f32 accumulation.
    scores = jnp.einsum(
        "gqd,gkd->gqk", q, k, preferred_element_type=jnp.float32
    )                                                 # (G, TQ, Lk) f32

    # TODO(synk): optional `mask` argument (masked_fill with -1e9) not wired in;
    #             the module is exercised with mask=None. Dropout is eval-mode
    #             identity and intentionally omitted.

    # Numerically-stable softmax over the key axis (matches F.softmax(dim=-1)).
    m = jnp.max(scores, axis=-1, keepdims=True)
    e = jnp.exp(scores - m)                           # unnormalized probs in (0, 1]
    denom = jnp.sum(e, axis=-1, keepdims=True)        # >= 1.0 always
    # EUP approx reciprocal (separate VLIW slot) + one Newton step on the tiny
    # (G, TQ, 1) column -> near-exact at negligible VPU cost.
    inv = pl.reciprocal(denom, approx=True)
    inv = inv * (2.0 - denom * inv)

    # Deferred normalization: PV matmul on the unnormalized e, then rescale the
    # small (G, TQ, Dv) result (O(TQ*Dv) multiply instead of O(TQ*Lk)).
    out = jnp.einsum(
        "gqk,gkd->gqd", e.astype(compute_dtype), v,
        preferred_element_type=jnp.float32
    ) * inv                                           # (G, TQ, Dv) f32

    attn_ref[...] = (e * inv).astype(attn_ref.dtype)
    out_ref[...] = out.astype(out_ref.dtype)


def _vmem_caps():
    """Generation-aware (per-step tile budget, Mosaic scoped VMEM limit) in bytes."""
    try:
        cap = int(pltpu.get_tpu_info().vmem_capacity_bytes)
    except Exception:
        cap = 64 * 1024 * 1024  # conservative fallback = v7x per-TC VMEM
    budget = max(8 * 1024 * 1024, int(cap * 0.30))   # ~19 MiB v7x, ~38 MiB v5e/v6e
    limit = max(16 * 1024 * 1024, int(cap * 0.75))   # ~48 MiB v7x, ~96 MiB v5e/v6e
    return budget, limit


def _choose_tiles(BH, Lq, Lk, Dk, Dv, itemsize, attn_itemsize, vmem_budget):
    """Pick (G = heads per step, TQ = query tile) under a per-step VMEM budget."""

    def step_bytes(G, TQ):
        io = (G * TQ * Dk * itemsize            # q block
              + G * TQ * Dv * itemsize          # out block
              + G * TQ * Lk * attn_itemsize)    # attn block
        kv = G * Lk * (Dk + Dv) * itemsize      # k + v blocks (resident over j)
        f32_live = 3 * G * TQ * Lk * 4          # scores, e, normalized/cast attn
        # q/out/attn and (by default) k/v are double-buffered by the pipeline.
        return 2 * io + 2 * kv + f32_live

    # Minimum TQ is dtype-aware so second-to-last dims never sit below the
    # sublane packing (8 for f32, 16 for bf16, 32 for int8/fp8).
    min_tq = {4: 8, 2: 16, 1: 32}.get(itemsize, 8)
    candidates = [t for t in (1024, 512, 256, 128, 64, 32, 16, 8)
                  if t <= Lq and Lq % t == 0 and t >= min_tq]
    if not candidates:
        candidates = [Lq]
    # Largest TQ that fits -> fewest grid steps, better MXU M-dim fill; the
    # scoped VMEM limit keeps ~2.5x headroom over the budget for the fallback.
    TQ = next((t for t in candidates if step_bytes(1, t) <= vmem_budget),
              candidates[-1])

    # Head grouping: only for small per-head work (amortizes ~0.35us/step).
    G = 1
    if TQ == Lq and Lq * Lk * itemsize <= 64 * 1024:
        for g in (16, 8, 4, 2):
            if BH % g == 0 and step_bytes(g, TQ) <= vmem_budget:
                G = g
                break
    return G, TQ


def scaled_dot_product_attention(q, k, v, temperature, mask=None, *,
                                 attn_dtype=None, use_bf16_matmul=False):
    """q, k: [B,H,L,Dk], v: [B,H,L,Dv] -> (output [B,H,Lq,Dv], attn [B,H,Lq,Lk])."""
    if mask is not None:
        # TODO(synk): mask (masked_fill(mask == 0, -1e9)) path not implemented.
        raise NotImplementedError("mask is not supported by this Pallas kernel")

    B, H, Lq, Dk = q.shape
    Lk = k.shape[2]
    Dv = v.shape[3]
    BH = B * H

    qf = q.reshape(BH, Lq, Dk)
    kf = k.reshape(BH, Lk, Dk)
    vf = v.reshape(BH, Lk, Dv)

    out_dtype = q.dtype
    attn_dtype = q.dtype if attn_dtype is None else jnp.dtype(attn_dtype)
    compute_dtype = jnp.bfloat16 if use_bf16_matmul else q.dtype

    vmem_budget, vmem_limit = _vmem_caps()
    G, TQ = _choose_tiles(BH, Lq, Lk, Dk, Dv, q.dtype.itemsize,
                          jnp.dtype(attn_dtype).itemsize, vmem_budget)

    kernel = partial(_sdpa_kernel,
                     inv_temperature=1.0 / float(temperature),
                     compute_dtype=compute_dtype)

    # TODO(synk): the (BH, Lq, Lk) attn writeback dominates HBM traffic; callers
    #             that do not consume attn should use an online-softmax (flash)
    #             variant, or pass attn_dtype=jnp.bfloat16 to halve the stream.
    # TODO(synk): K/V blocks are constant along j but still double-buffered by
    #             the default pipeline; a manual single-buffered copy
    #             (memory_space=pl.ANY + make_async_copy) would reclaim that
    #             VMEM on v7x's 64 MiB parts.
    # TODO(synk): for Dv < 128 a lane-dense [B, Lq, H*Dv] output layout would
    #             avoid masked partial stores; left as-is since attn dominates.
    out_f, attn_f = pl.pallas_call(
        kernel,
        out_shape=(
            jax.ShapeDtypeStruct((BH, Lq, Dv), out_dtype),
            jax.ShapeDtypeStruct((BH, Lq, Lk), attn_dtype),
        ),
        grid_spec=pltpu.PrefetchScalarGridSpec(
            num_scalar_prefetch=0,
            grid=(BH // G, Lq // TQ),
            in_specs=[
                pl.BlockSpec((G, TQ, Dk), lambda i, j: (i, j, 0)),
                pl.BlockSpec((G, Lk, Dk), lambda i, j: (i, 0, 0)),  # reused over j
                pl.BlockSpec((G, Lk, Dv), lambda i, j: (i, 0, 0)),  # reused over j
            ],
            out_specs=[
                pl.BlockSpec((G, TQ, Dv), lambda i, j: (i, j, 0)),
                pl.BlockSpec((G, TQ, Lk), lambda i, j: (i, j, 0)),
            ],
        ),
        compiler_params=pltpu.CompilerParams(
            # Megacore (v7x) must split along heads (i), never across query
            # tiles (j) of the same head, to preserve K/V reuse over j.
            dimension_semantics=("parallel", "arbitrary"),
            vmem_limit_bytes=vmem_limit,
        ),
    )(qf, kf, vf)

    return out_f.reshape(B, H, Lq, Dv), attn_f.reshape(B, H, Lq, Lk)


if __name__ == "__main__":
    # Small deterministic example: batch=2, heads=2, seq=8, head_dim=32
    B, H, L, D = 2, 2, 8, 32
    temperature = math.sqrt(D)  # standard d_k ** 0.5

    key = jax.random.PRNGKey(0)
    kq, kk, kv = jax.random.split(key, 3)
    q = jax.random.normal(kq, (B, H, L, D), dtype=jnp.float32)
    k = jax.random.normal(kk, (B, H, L, D), dtype=jnp.float32)
    v = jax.random.normal(kv, (B, H, L, D), dtype=jnp.float32)

    out, attn = scaled_dot_product_attention(q, k, v, temperature)
    out = jax.block_until_ready(out)
    attn = jax.block_until_ready(attn)

    # Pure-JAX reference check
    scores = jnp.einsum("bhqd,bhkd->bhqk", q / temperature, k)
    attn_ref = jax.nn.softmax(scores, axis=-1)
    out_ref = jnp.einsum("bhqk,bhkd->bhqd", attn_ref, v)

    assert jnp.allclose(attn, attn_ref, atol=1e-4, rtol=1e-4)
    assert jnp.allclose(out, out_ref, atol=1e-4, rtol=1e-4)

    print("KERNEL_OK")
</pallas_src>

<mosaic_0001>
module attributes {stable_mosaic.version = 11 : i64} {
  func.func @_sdpa_kernel(%arg0: i32, %arg1: i32, %arg2: memref<4x8x32xf32, #tpu.memory_space<vmem>>, %arg3: memref<4x8x32xf32, #tpu.memory_space<vmem>>, %arg4: memref<4x8x32xf32, #tpu.memory_space<vmem>>, %arg5: memref<4x8x32xf32, #tpu.memory_space<vmem>>, %arg6: memref<4x8x8xf32, #tpu.memory_space<vmem>>) attributes {dimension_semantics = [#tpu.dimension_semantics<parallel>, #tpu.dimension_semantics<arbitrary>], iteration_bounds = array<i64: 1, 1>, scalar_prefetch = 0 : i64, scratch_operands = 0 : i64, tpu.core_type = #tpu.core_type<tc>, window_params = [{transform_indices = @transform_0, window_bounds = array<i64: 4, 8, 32>}, {transform_indices = @transform_1, window_bounds = array<i64: 4, 8, 32>}, {transform_indices = @transform_2, window_bounds = array<i64: 4, 8, 32>}, {transform_indices = @transform_3, window_bounds = array<i64: 4, 8, 32>}, {transform_indices = @transform_4, window_bounds = array<i64: 4, 8, 8>}]} {
    %c0 = arith.constant 0 : index
    %c0_0 = arith.constant 0 : index
    %c0_1 = arith.constant 0 : index
    %0 = vector.load %arg2[%c0, %c0_0, %c0_1] : memref<4x8x32xf32, #tpu.memory_space<vmem>>, vector<4x8x32xf32>
    %cst = arith.constant 0.176776692 : f32
    %1 = vector.broadcast %cst : f32 to vector<4x8x32xf32>
    %2 = arith.mulf %0, %1 : vector<4x8x32xf32>
    %c0_2 = arith.constant 0 : index
    %c0_3 = arith.constant 0 : index
    %c0_4 = arith.constant 0 : index
    %3 = vector.load %arg3[%c0_2, %c0_3, %c0_4] : memref<4x8x32xf32, #tpu.memory_space<vmem>>, vector<4x8x32xf32>
    %c0_5 = arith.constant 0 : index
    %c0_6 = arith.constant 0 : index
    %c0_7 = arith.constant 0 : index
    %4 = vector.load %arg4[%c0_5, %c0_6, %c0_7] : memref<4x8x32xf32, #tpu.memory_space<vmem>>, vector<4x8x32xf32>
    "tpu.trace_start"() <{level = 10 : i32, message = "gqd,gkd->gqk"}> : () -> ()
    %cst_8 = arith.constant dense<0.000000e+00> : vector<4x8x8xf32>
    %5 = tpu.matmul %2, %3, %cst_8 {dimension_numbers = #tpu.dot_dimension_numbers<[2], [2], [1], [1], [0, 0, 0, 1, 1, 1], [0], [0]>} : vector<4x8x32xf32>, vector<4x8x32xf32>, vector<4x8x8xf32> -> vector<4x8x8xf32>
    "tpu.trace_stop"() : () -> ()
    %cst_9 = arith.constant dense<0xFF800000> : vector<4x8xf32>
    %6 = vector.multi_reduction <maximumf>, %5, %cst_9 [2] : vector<4x8x8xf32> to vector<4x8xf32>
    %7 = vector.shape_cast %6 : vector<4x8xf32> to vector<4x8x1xf32>
    %8 = vector.broadcast %7 : vector<4x8x1xf32> to vector<4x8x8xf32>
    %9 = arith.subf %5, %8 : vector<4x8x8xf32>
    %10 = math.exp %9 : vector<4x8x8xf32>
    %cst_10 = arith.constant dense<0.000000e+00> : vector<4x8xf32>
    %11 = vector.multi_reduction <add>, %10, %cst_10 [2] : vector<4x8x8xf32> to vector<4x8xf32>
    %12 = vector.shape_cast %11 : vector<4x8xf32> to vector<4x8x1xf32>
    %13 = tpu.reciprocal %12 {approx = true} : vector<4x8x1xf32> -> vector<4x8x1xf32>
    %14 = arith.mulf %12, %13 : vector<4x8x1xf32>
    %cst_11 = arith.constant 2.000000e+00 : f32
    %15 = vector.broadcast %cst_11 : f32 to vector<4x8x1xf32>
    %16 = arith.subf %15, %14 : vector<4x8x1xf32>
    %17 = arith.mulf %13, %16 : vector<4x8x1xf32>
    "tpu.trace_start"() <{level = 10 : i32, message = "gqk,gkd->gqd"}> : () -> ()
    %cst_12 = arith.constant dense<0.000000e+00> : vector<4x8x32xf32>
    %18 = tpu.matmul %10, %4, %cst_12 {dimension_numbers = #tpu.dot_dimension_numbers<[2], [1], [1], [2], [0, 0, 0, 1, 1, 2], [0], [0]>} : vector<4x8x8xf32>, vector<4x8x32xf32>, vector<4x8x32xf32> -> vector<4x8x32xf32>
    "tpu.trace_stop"() : () -> ()
    %19 = vector.broadcast %17 : vector<4x8x1xf32> to vector<4x8x32xf32>
    %20 = arith.mulf %18, %19 : vector<4x8x32xf32>
    %21 = vector.broadcast %17 : vector<4x8x1xf32> to vector<4x8x8xf32>
    %22 = arith.mulf %10, %21 : vector<4x8x8xf32>
    %c0_13 = arith.constant 0 : index
    %c0_14 = arith.constant 0 : index
    %c0_15 = arith.constant 0 : index
    %23 = vector.load %arg6[%c0_13, %c0_14, %c0_15] : memref<4x8x8xf32, #tpu.memory_space<vmem>>, vector<4x8x8xf32>
    tpu.vector_store %arg6[%c0_13, %c0_14, %c0_15], %22 {strides = array<i32>} : memref<4x8x8xf32, #tpu.memory_space<vmem>>, vector<4x8x8xf32>,
    %c0_16 = arith.constant 0 : index
    %c0_17 = arith.constant 0 : index
    %c0_18 = arith.constant 0 : index
    %24 = vector.load %arg5[%c0_16, %c0_17, %c0_18] : memref<4x8x32xf32, #tpu.memory_space<vmem>>, vector<4x8x32xf32>
    tpu.vector_store %arg5[%c0_16, %c0_17, %c0_18], %20 {strides = array<i32>} : memref<4x8x32xf32, #tpu.memory_space<vmem>>, vector<4x8x32xf32>,
    return
  }
  func.func @transform_0(%arg0: i32, %arg1: i32) -> (i32, i32, i32) {
    %c0_i32 = arith.constant 0 : i32
    %c0_i32_0 = arith.constant 0 : i32
    return %arg0, %arg1, %c0_i32 : i32, i32, i32
  }
  func.func @transform_1(%arg0: i32, %arg1: i32) -> (i32, i32, i32) {
    %c0_i32 = arith.constant 0 : i32
    %c0_i32_0 = arith.constant 0 : i32
    %c0_i32_1 = arith.constant 0 : i32
    return %arg0, %c0_i32, %c0_i32_0 : i32, i32, i32
  }
  func.func @transform_2(%arg0: i32, %arg1: i32) -> (i32, i32, i32) {
    %c0_i32 = arith.constant 0 : i32
    %c0_i32_0 = arith.constant 0 : i32
    %c0_i32_1 = arith.constant 0 : i32
    return %arg0, %c0_i32, %c0_i32_0 : i32, i32, i32
  }
  func.func @transform_3(%arg0: i32, %arg1: i32) -> (i32, i32, i32) {
    %c0_i32 = arith.constant 0 : i32
    %c0_i32_0 = arith.constant 0 : i32
    return %arg0, %arg1, %c0_i32 : i32, i32, i32
  }
  func.func @transform_4(%arg0: i32, %arg1: i32) -> (i32, i32, i32) {
    %c0_i32 = arith.constant 0 : i32
    %c0_i32_0 = arith.constant 0 : i32
    return %arg0, %arg1, %c0_i32 : i32, i32, i32
  }
}

</mosaic_0001>

<llo_original>
// kernel: tpu_custom_call.1
$region0: #{tpu_custom_call.1}
  #allocation0 [shape = 'u32[]', space=smem, size = 0x4, offset = 0x4, fixed_abs, tag = 'smem constant byte address 0x4 - core index']
  #allocation1 [shape = 'u32[144,128]{1,0:T(1,128)}', space=vmem, size = 0x12000, scoped, tag = 'internal scratch']
  %s0 = inlined_call_operand.hbm [shape: f32[4,8,32], index: 0, kind: input, shape index: {}]
  %s1 = inlined_call_operand.hbm [shape: f32[4,8,32], index: 1, kind: input, shape index: {}]
  %s2 = inlined_call_operand.hbm [shape: f32[4,8,32], index: 2, kind: input, shape index: {}]
  %s3 = inlined_call_operand.hbm [shape: f32[4,8,32], index: 3, kind: output, shape index: {0}]
  %s4 = inlined_call_operand.hbm [shape: f32[4,8,8], index: 4, kind: output, shape index: {1}]
  %5 = xla_tuple %s3, %s4
  %s6 = sld [smem:[#allocation0]]
  $region42: #{tpu_custom_call.1} parent=0
    _
  %s8 = ssub.s32 1, %s6
  %s9 = scalar_select 0, %s8, %s6
  $region1: #{tpu_custom_call.1} parent=0
    #allocation2 [shape = 'u8[16384]{0}', space=vmem, size = 0x4000, scoped, tag = 'input window, operand 0, single buffered']
    #allocation3 [shape = 's32[1]{0}', space=sflag, size = 0x4, scoped, tag = 'scoped memory for tpu_custom_call.1']
    #allocation4 [shape = 's32[1]{0}', space=sflag, size = 0x4, scoped, tag = 'scoped memory for tpu_custom_call.1']
    #allocation5 [shape = 'u8[16384]{0}', space=vmem, size = 0x4000, scoped, tag = 'input window, operand 1, single buffered']
    #allocation6 [shape = 's32[1]{0}', space=sflag, size = 0x4, scoped, tag = 'scoped memory for tpu_custom_call.1']
    #allocation7 [shape = 'u8[16384]{0}', space=vmem, size = 0x4000, scoped, tag = 'input window, operand 2, single buffered']
    #allocation8 [shape = 'u8[16384]{0}', space=vmem, size = 0x4000, scoped, tag = 'output window, operand 0, single buffered']
    #allocation9 [shape = 'u8[16384]{0}', space=vmem, size = 0x4000, scoped, tag = 'output window, operand 1, single buffered']
    #allocation10 [shape = 's32[1]{0}', space=sflag, size = 0x4, scoped, tag = 'scoped memory for tpu_custom_call.1']
    %10 = vsyncpa [#allocation3], 0
    %11 = vsyncpa [#allocation6], 0
    %12 = vsyncpa [#allocation4], 0
    %13 = vsyncpa [#allocation10], 0
    // Predicated region
    $region2: #{tpu_custom_call.1} parent=1 // pred_check
      _
    $region3: #{tpu_custom_call.1} parent=1 // pred_check_branch
      %15 = sbr.rel (0) target = $region5
    $region4: #{tpu_custom_call.1} parent=1 // pred_region
      %s17 = ssub.s32 512, 512
      %18 = vsyncadd [#allocation3], %s17
      %s19 = sshll.u32 [#allocation2], 4
      %s20 = int_to_ptr.vmem [resolvable:$true] %s19
      %25 = dma.hbm_to_vmem [thread:$0]  %s0, 512, %s20, [#allocation3], 128, 128, 8
    $region5: #{tpu_custom_call.1} parent=1 // pred_fallthru
      _
    // Predicated region
    $region6: #{tpu_custom_call.1} parent=1 // pred_check
      _
    $region7: #{tpu_custom_call.1} parent=1 // pred_check_branch
      %27 = sbr.rel (0) target = $region9
    $region8: #{tpu_custom_call.1} parent=1 // pred_region
      %s29 = ssub.s32 512, 512
      %30 = vsyncadd [#allocation6], %s29
      %s31 = sshll.u32 [#allocation5], 4
      %s32 = int_to_ptr.vmem [resolvable:$true] %s31
      %37 = dma.hbm_to_vmem [thread:$0]  %s1, 512, %s32, [#allocation6], 128, 128, 8
    $region9: #{tpu_custom_call.1} parent=1 // pred_fallthru
      _
    // Predicated region
    $region10: #{tpu_custom_call.1} parent=1 // pred_check
      _
    $region11: #{tpu_custom_call.1} parent=1 // pred_check_branch
      %39 = sbr.rel (0) target = $region13
    $region12: #{tpu_custom_call.1} parent=1 // pred_region
      %s41 = ssub.s32 512, 512
      %42 = vsyncadd [#allocation6], %s41
      %s43 = sshll.u32 [#allocation7], 4
      %s44 = int_to_ptr.vmem [resolvable:$true] %s43
      %49 = dma.hbm_to_vmem [thread:$0]  %s2, 512, %s44, [#allocation6], 128, 128, 8
    $region13: #{tpu_custom_call.1} parent=1 // pred_fallthru
      _
    // Predicated region
    $region14: #{tpu_custom_call.1} parent=1 // pred_check
      _
    $region15: #{tpu_custom_call.1} parent=1 // pred_check_branch
      %51 = sbr.rel (0) target = $region17
    $region16: #{tpu_custom_call.1} parent=1 // pred_region
      %52 = dma.done [#allocation3], 512
    $region17: #{tpu_custom_call.1} parent=1 // pred_fallthru
      _
    // Predicated region
    $region18: #{tpu_custom_call.1} parent=1 // pred_check
      _
    $region19: #{tpu_custom_call.1} parent=1 // pred_check_branch
      %54 = sbr.rel (0) target = $region21
    $region20: #{tpu_custom_call.1} parent=1 // pred_region
      %55 = dma.done [#allocation6], 512
    $region21: #{tpu_custom_call.1} parent=1 // pred_fallthru
      _
    // Predicated region
    $region22: #{tpu_custom_call.1} parent=1 // pred_check
      _
    $region23: #{tpu_custom_call.1} parent=1 // pred_check_branch
      %57 = sbr.rel (0) target = $region25
    $region24: #{tpu_custom_call.1} parent=1 // pred_region
      %58 = dma.done [#allocation6], 512
    $region25: #{tpu_custom_call.1} parent=1 // pred_fallthru
      _
    %v59 = vld [vmem:[#allocation2] sm:$0xff]
    %v60 = vld [vmem:[#allocation2 + $0x8] sm:$0xff]
    %v61 = vld [vmem:[#allocation2 + $0x10] sm:$0xff]
    %v62 = vld [vmem:[#allocation2 + $0x18] sm:$0xff]
    %v63 = vmul.f32 %v59, 0.17677669
    %v64 = vmul.f32 %v60, 0.17677669
    %v65 = vmul.f32 %v61, 0.17677669
    %v66 = vmul.f32 %v62, 0.17677669
    %v67 = vld [vmem:[#allocation5] sm:$0xff]
    %v68 = vld [vmem:[#allocation5 + $0x8] sm:$0xff]
    %v69 = vld [vmem:[#allocation5 + $0x10] sm:$0xff]
    %v70 = vld [vmem:[#allocation5 + $0x18] sm:$0xff]
    %v71 = vld [vmem:[#allocation7] sm:$0xff]
    %v72 = vld [vmem:[#allocation7 + $0x8] sm:$0xff]
    %v73 = vld [vmem:[#allocation7 + $0x10] sm:$0xff]
    %v74 = vld [vmem:[#allocation7 + $0x18] sm:$0xff]
    %vm75 = vcmask 261120
    %v77 = vsel %vm75, %v63, 0
    %v80 = vsel %vm75, %v67, 0
    %82 = vmatprep.subr.mxu0 0.0
    %83 = vmatpush1.xpose.msra.mxu0 0.0
    %84 = vmatprep.subr.mxu0 0.0
    %85 = vmatpush1.xpose.msra.mxu0 0.0
    %86 = vmatprep.subr.mxu0 0.0
    %87 = vmatpush1.xpose.msra.mxu0 0.0
    %88 = vmatprep.subr.mxu0 0.0
    %89 = vmatpush1.xpose.msra.mxu0 0.0
    %90 = vmatprep.subr.mxu0 0.0
    %91 = vmatpush1.xpose.msra.mxu0 0.0
    %92 = vmatprep.subr.mxu0 0.0
    %93 = vmatpush1.xpose.msra.mxu0 0.0
    %94 = vmatprep.subr.mxu0 0.0
    %95 = vmatpush1.xpose.msra.mxu0 0.0
    %96 = vmatprep.subr.mxu0 0.0
    %97 = vmatpush1.xpose.msra.mxu0 0.0
    %98 = vmatprep.subr.mxu0 0.0
    %99 = vmatpush1.xpose.msra.mxu0 0.0
    %100 = vmatprep.subr.mxu0 0.0
    %101 = vmatpush1.xpose.msra.mxu0 0.0
    %102 = vmatprep.subr.mxu0 0.0
    %103 = vmatpush1.xpose.msra.mxu0 0.0
    %104 = vmatprep.subr.mxu0 0.0
    %105 = vmatpush1.xpose.msra.mxu0 0.0
    %106 = vmatprep.subr.mxu0 0.0
    %107 = vmatpush1.xpose.msra.mxu0 0.0
    %108 = vmatprep.subr.mxu0 0.0
    %109 = vmatpush1.xpose.msra.mxu0 0.0
    %110 = vmatprep.subr.mxu0 0.0
    %111 = vmatpush1.xpose.msra.mxu0 0.0
    %112 = vmatprep.subr.mxu0 0.0
    %113 = vmatpush1.xpose.msra.mxu0 %v80
    %114 = vmatprep.subr.mxu0 0.0
    %115 = vmatpush2.xpose.msra.mxu0 0.0
    %116 = vmatprep.subr.mxu0 0.0
    %117 = vmatpush2.xpose.msra.mxu0 0.0
    %118 = vmatprep.subr.mxu0 0.0
    %119 = vmatpush2.xpose.msra.mxu0 0.0
    %120 = vmatprep.subr.mxu0 0.0
    %121 = vmatpush2.xpose.msra.mxu0 0.0
    %122 = vmatprep.subr.mxu0 0.0
    %123 = vmatpush2.xpose.msra.mxu0 0.0
    %124 = vmatprep.subr.mxu0 0.0
    %125 = vmatpush2.xpose.msra.mxu0 0.0
    %126 = vmatprep.subr.mxu0 0.0
    %127 = vmatpush2.xpose.msra.mxu0 0.0
    %128 = vmatprep.subr.mxu0 0.0
    %129 = vmatpush2.xpose.msra.mxu0 0.0
    %130 = vmatprep.subr.mxu0 0.0
    %131 = vmatpush2.xpose.msra.mxu0 0.0
    %132 = vmatprep.subr.mxu0 0.0
    %133 = vmatpush2.xpose.msra.mxu0 0.0
    %134 = vmatprep.subr.mxu0 0.0
    %135 = vmatpush2.xpose.msra.mxu0 0.0
    %136 = vmatprep.subr.mxu0 0.0
    %137 = vmatpush2.xpose.msra.mxu0 0.0
    %138 = vmatprep.subr.mxu0 0.0
    %139 = vmatpush2.xpose.msra.mxu0 0.0
    %140 = vmatprep.subr.mxu0 0.0
    %141 = vmatpush2.xpose.msra.mxu0 0.0
    %142 = vmatprep.subr.mxu0 0.0
    %143 = vmatpush2.xpose.msra.mxu0 0.0
    %144 = vmatprep.subr.mxu0 0.0
    %145 = vmatpush2.xpose.msra.mxu0 0.0
    %146 = vmatprep.mubr.f32.mxu0 0.0
    %147 = vmatmul.mubr.f32.gmra.mxu0 %v77
    %v148 = vpop.f32.mrf.mxu0
    %v149 = vadd.f32 0.0, %v148
    %v150 = vpop.f32.mrf.mxu0
    %151 = vdwg.mxu0
    %v153 = vsel %vm75, %v64, 0
    %v156 = vsel %vm75, %v68, 0
    %158 = vmatprep.subr.mxu0 0.0
    %159 = vmatpush1.xpose.msra.mxu0 0.0
    %160 = vmatprep.subr.mxu0 0.0
    %161 = vmatpush1.xpose.msra.mxu0 0.0
    %162 = vmatprep.subr.mxu0 0.0
    %163 = vmatpush1.xpose.msra.mxu0 0.0
    %164 = vmatprep.subr.mxu0 0.0
    %165 = vmatpush1.xpose.msra.mxu0 0.0
    %166 = vmatprep.subr.mxu0 0.0
    %167 = vmatpush1.xpose.msra.mxu0 0.0
    %168 = vmatprep.subr.mxu0 0.0
    %169 = vmatpush1.xpose.msra.mxu0 0.0
    %170 = vmatprep.subr.mxu0 0.0
    %171 = vmatpush1.xpose.msra.mxu0 0.0
    %172 = vmatprep.subr.mxu0 0.0
    %173 = vmatpush1.xpose.msra.mxu0 0.0
    %174 = vmatprep.subr.mxu0 0.0
    %175 = vmatpush1.xpose.msra.mxu0 0.0
    %176 = vmatprep.subr.mxu0 0.0
    %177 = vmatpush1.xpose.msra.mxu0 0.0
    %178 = vmatprep.subr.mxu0 0.0
    %179 = vmatpush1.xpose.msra.mxu0 0.0
    %180 = vmatprep.subr.mxu0 0.0
    %181 = vmatpush1.xpose.msra.mxu0 0.0
    %182 = vmatprep.subr.mxu0 0.0
    %183 = vmatpush1.xpose.msra.mxu0 0.0
    %184 = vmatprep.subr.mxu0 0.0
    %185 = vmatpush1.xpose.msra.mxu0 0.0
    %186 = vmatprep.subr.mxu0 0.0
    %187 = vmatpush1.xpose.msra.mxu0 0.0
    %188 = vmatprep.subr.mxu0 0.0
    %189 = vmatpush1.xpose.msra.mxu0 %v156
    %190 = vmatprep.subr.mxu0 0.0
    %191 = vmatpush2.xpose.msra.mxu0 0.0
    %192 = vmatprep.subr.mxu0 0.0
    %193 = vmatpush2.xpose.msra.mxu0 0.0
    %194 = vmatprep.subr.mxu0 0.0
    %195 = vmatpush2.xpose.msra.mxu0 0.0
    %196 = vmatprep.subr.mxu0 0.0
    %197 = vmatpush2.xpose.msra.mxu0 0.0
    %198 = vmatprep.subr.mxu0 0.0
    %199 = vmatpush2.xpose.msra.mxu0 0.0
    %200 = vmatprep.subr.mxu0 0.0
    %201 = vmatpush2.xpose.msra.mxu0 0.0
    %202 = vmatprep.subr.mxu0 0.0
    %203 = vmatpush2.xpose.msra.mxu0 0.0
    %204 = vmatprep.subr.mxu0 0.0
    %205 = vmatpush2.xpose.msra.mxu0 0.0
    %206 = vmatprep.subr.mxu0 0.0
    %207 = vmatpush2.xpose.msra.mxu0 0.0
    %208 = vmatprep.subr.mxu0 0.0
    %209 = vmatpush2.xpose.msra.mxu0 0.0
    %210 = vmatprep.subr.mxu0 0.0
    %211 = vmatpush2.xpose.msra.mxu0 0.0
    %212 = vmatprep.subr.mxu0 0.0
    %213 = vmatpush2.xpose.msra.mxu0 0.0
    %214 = vmatprep.subr.mxu0 0.0
    %215 = vmatpush2.xpose.msra.mxu0 0.0
    %216 = vmatprep.subr.mxu0 0.0
    %217 = vmatpush2.xpose.msra.mxu0 0.0
    %218 = vmatprep.subr.mxu0 0.0
    %219 = vmatpush2.xpose.msra.mxu0 0.0
    %220 = vmatprep.subr.mxu0 0.0
    %221 = vmatpush2.xpose.msra.mxu0 0.0
    %222 = vmatprep.mubr.f32.mxu0 0.0
    %223 = vmatmul.mubr.f32.gmra.mxu0 %v153
    %v224 = vpop.f32.mrf.mxu0
    %v225 = vadd.f32 0.0, %v224
    %v226 = vpop.f32.mrf.mxu0
    %227 = vdwg.mxu0
    %v229 = vsel %vm75, %v65, 0
    %v232 = vsel %vm75, %v69, 0
    %234 = vmatprep.subr.mxu0 0.0
    %235 = vmatpush1.xpose.msra.mxu0 0.0
    %236 = vmatprep.subr.mxu0 0.0
    %237 = vmatpush1.xpose.msra.mxu0 0.0
    %238 = vmatprep.subr.mxu0 0.0
    %239 = vmatpush1.xpose.msra.mxu0 0.0
    %240 = vmatprep.subr.mxu0 0.0
    %241 = vmatpush1.xpose.msra.mxu0 0.0
    %242 = vmatprep.subr.mxu0 0.0
    %243 = vmatpush1.xpose.msra.mxu0 0.0
    %244 = vmatprep.subr.mxu0 0.0
    %245 = vmatpush1.xpose.msra.mxu0 0.0
    %246 = vmatprep.subr.mxu0 0.0
    %247 = vmatpush1.xpose.msra.mxu0 0.0
    %248 = vmatprep.subr.mxu0 0.0
    %249 = vmatpush1.xpose.msra.mxu0 0.0
    %250 = vmatprep.subr.mxu0 0.0
    %251 = vmatpush1.xpose.msra.mxu0 0.0
    %252 = vmatprep.subr.mxu0 0.0
    %253 = vmatpush1.xpose.msra.mxu0 0.0
    %254 = vmatprep.subr.mxu0 0.0
    %255 = vmatpush1.xpose.msra.mxu0 0.0
    %256 = vmatprep.subr.mxu0 0.0
    %257 = vmatpush1.xpose.msra.mxu0 0.0
    %258 = vmatprep.subr.mxu0 0.0
    %259 = vmatpush1.xpose.msra.mxu0 0.0
    %260 = vmatprep.subr.mxu0 0.0
    %261 = vmatpush1.xpose.msra.mxu0 0.0
    %262 = vmatprep.subr.mxu0 0.0
    %263 = vmatpush1.xpose.msra.mxu0 0.0
    %264 = vmatprep.subr.mxu0 0.0
    %265 = vmatpush1.xpose.msra.mxu0 %v232
    %266 = vmatprep.subr.mxu0 0.0
    %267 = vmatpush2.xpose.msra.mxu0 0.0
    %268 = vmatprep.subr.mxu0 0.0
    %269 = vmatpush2.xpose.msra.mxu0 0.0
    %270 = vmatprep.subr.mxu0 0.0
    %271 = vmatpush2.xpose.msra.mxu0 0.0
    %272 = vmatprep.subr.mxu0 0.0
    %273 = vmatpush2.xpose.msra.mxu0 0.0
    %274 = vmatprep.subr.mxu0 0.0
    %275 = vmatpush2.xpose.msra.mxu0 0.0
    %276 = vmatprep.subr.mxu0 0.0
    %277 = vmatpush2.xpose.msra.mxu0 0.0
    %278 = vmatprep.subr.mxu0 0.0
    %279 = vmatpush2.xpose.msra.mxu0 0.0
    %280 = vmatprep.subr.mxu0 0.0
    %281 = vmatpush2.xpose.msra.mxu0 0.0
    %282 = vmatprep.subr.mxu0 0.0
    %283 = vmatpush2.xpose.msra.mxu0 0.0
    %284 = vmatprep.subr.mxu0 0.0
    %285 = vmatpush2.xpose.msra.mxu0 0.0
    %286 = vmatprep.subr.mxu0 0.0
    %287 = vmatpush2.xpose.msra.mxu0 0.0
    %288 = vmatprep.subr.mxu0 0.0
    %289 = vmatpush2.xpose.msra.mxu0 0.0
    %290 = vmatprep.subr.mxu0 0.0
    %291 = vmatpush2.xpose.msra.mxu0 0.0
    %292 = vmatprep.subr.mxu0 0.0
    %293 = vmatpush2.xpose.msra.mxu0 0.0
    %294 = vmatprep.subr.mxu0 0.0
    %295 = vmatpush2.xpose.msra.mxu0 0.0
    %296 = vmatprep.subr.mxu0 0.0
    %297 = vmatpush2.xpose.msra.mxu0 0.0
    %298 = vmatprep.mubr.f32.mxu0 0.0
    %299 = vmatmul.mubr.f32.gmra.mxu0 %v229
    %v300 = vpop.f32.mrf.mxu0
    %v301 = vadd.f32 0.0, %v300
    %v302 = vpop.f32.mrf.mxu0
    %303 = vdwg.mxu0
    %v305 = vsel %vm75, %v66, 0
    %v308 = vsel %vm75, %v70, 0
    %310 = vmatprep.subr.mxu0 0.0
    %311 = vmatpush1.xpose.msra.mxu0 0.0
    %312 = vmatprep.subr.mxu0 0.0
    %313 = vmatpush1.xpose.msra.mxu0 0.0
    %314 = vmatprep.subr.mxu0 0.0
    %315 = vmatpush1.xpose.msra.mxu0 0.0
    %316 = vmatprep.subr.mxu0 0.0
    %317 = vmatpush1.xpose.msra.mxu0 0.0
    %318 = vmatprep.subr.mxu0 0.0
    %319 = vmatpush1.xpose.msra.mxu0 0.0
    %320 = vmatprep.subr.mxu0 0.0
    %321 = vmatpush1.xpose.msra.mxu0 0.0
    %322 = vmatprep.subr.mxu0 0.0
    %323 = vmatpush1.xpose.msra.mxu0 0.0
    %324 = vmatprep.subr.mxu0 0.0
    %325 = vmatpush1.xpose.msra.mxu0 0.0
    %326 = vmatprep.subr.mxu0 0.0
    %327 = vmatpush1.xpose.msra.mxu0 0.0
    %328 = vmatprep.subr.mxu0 0.0
    %329 = vmatpush1.xpose.msra.mxu0 0.0
    %330 = vmatprep.subr.mxu0 0.0
    %331 = vmatpush1.xpose.msra.mxu0 0.0
    %332 = vmatprep.subr.mxu0 0.0
    %333 = vmatpush1.xpose.msra.mxu0 0.0
    %334 = vmatprep.subr.mxu0 0.0
    %335 = vmatpush1.xpose.msra.mxu0 0.0
    %336 = vmatprep.subr.mxu0 0.0
    %337 = vmatpush1.xpose.msra.mxu0 0.0
    %338 = vmatprep.subr.mxu0 0.0
    %339 = vmatpush1.xpose.msra.mxu0 0.0
    %340 = vmatprep.subr.mxu0 0.0
    %341 = vmatpush1.xpose.msra.mxu0 %v308
    %342 = vmatprep.subr.mxu0 0.0
    %343 = vmatpush2.xpose.msra.mxu0 0.0
    %344 = vmatprep.subr.mxu0 0.0
    %345 = vmatpush2.xpose.msra.mxu0 0.0
    %346 = vmatprep.subr.mxu0 0.0
    %347 = vmatpush2.xpose.msra.mxu0 0.0
    %348 = vmatprep.subr.mxu0 0.0
    %349 = vmatpush2.xpose.msra.mxu0 0.0
    %350 = vmatprep.subr.mxu0 0.0
    %351 = vmatpush2.xpose.msra.mxu0 0.0
    %352 = vmatprep.subr.mxu0 0.0
    %353 = vmatpush2.xpose.msra.mxu0 0.0
    %354 = vmatprep.subr.mxu0 0.0
    %355 = vmatpush2.xpose.msra.mxu0 0.0
    %356 = vmatprep.subr.mxu0 0.0
    %357 = vmatpush2.xpose.msra.mxu0 0.0
    %358 = vmatprep.subr.mxu0 0.0
    %359 = vmatpush2.xpose.msra.mxu0 0.0
    %360 = vmatprep.subr.mxu0 0.0
    %361 = vmatpush2.xpose.msra.mxu0 0.0
    %362 = vmatprep.subr.mxu0 0.0
    %363 = vmatpush2.xpose.msra.mxu0 0.0
    %364 = vmatprep.subr.mxu0 0.0
    %365 = vmatpush2.xpose.msra.mxu0 0.0
    %366 = vmatprep.subr.mxu0 0.0
    %367 = vmatpush2.xpose.msra.mxu0 0.0
    %368 = vmatprep.subr.mxu0 0.0
    %369 = vmatpush2.xpose.msra.mxu0 0.0
    %370 = vmatprep.subr.mxu0 0.0
    %371 = vmatpush2.xpose.msra.mxu0 0.0
    %372 = vmatprep.subr.mxu0 0.0
    %373 = vmatpush2.xpose.msra.mxu0 0.0
    %374 = vmatprep.mubr.f32.mxu0 0.0
    %375 = vmatmul.mubr.f32.gmra.mxu0 %v305
    %v376 = vpop.f32.mrf.mxu0
    %v377 = vadd.f32 0.0, %v376
    %v378 = vpop.f32.mrf.mxu0
    %379 = vdwg.mxu0
    %vm380 = vcmask 64512
    %v381 = vsel %vm380, %v149, -inf
    %382 = vmax.xlane.f32.xlu0 %v381
    %v383 = vpop.xlane.xlu0 %382
    %v384 = vsel %vm380, %v225, -inf
    %385 = vmax.xlane.f32.xlu0 %v384
    %v386 = vpop.xlane.xlu0 %385
    %v387 = vsel %vm380, %v301, -inf
    %388 = vmax.xlane.f32.xlu0 %v387
    %v389 = vpop.xlane.xlu0 %388
    %v390 = vsel %vm380, %v377, -inf
    %391 = vmax.xlane.f32.xlu0 %v390
    %v392 = vpop.xlane.xlu0 %391
    %v393 = vsub.f32 %v149, %v383
    %v394 = vsub.f32 %v225, %v386
    %v395 = vsub.f32 %v301, %v389
    %v396 = vsub.f32 %v377, %v392
    %v397 = vmul.f32 %v393, 1.442695
    %v398 = vpow.pop %v397
    %v399 = vmul.f32 %v394, 1.442695
    %v400 = vpow.pop %v399
    %v401 = vmul.f32 %v395, 1.442695
    %v402 = vpow.pop %v401
    %v403 = vmul.f32 %v396, 1.442695
    %v404 = vpow.pop %v403
    %v405 = vsel %vm380, %v398, 0.0
    %406 = vadd.xlane.f32.xlu0 %v405
    %v407 = vpop.xlane.xlu0 %406
    %v408 = vsel %vm380, %v400, 0.0
    %409 = vadd.xlane.f32.xlu0 %v408
    %v410 = vpop.xlane.xlu0 %409
    %v411 = vsel %vm380, %v402, 0.0
    %412 = vadd.xlane.f32.xlu0 %v411
    %v413 = vpop.xlane.xlu0 %412
    %v414 = vsel %vm380, %v404, 0.0
    %415 = vadd.xlane.f32.xlu0 %v414
    %v416 = vpop.xlane.xlu0 %415
    %v417 = vrcp.pop %v407
    %v418 = vrcp.pop %v410
    %v419 = vrcp.pop %v413
    %v420 = vrcp.pop %v416
    %v421 = vmul.f32 %v407, %v417
    %v422 = vmul.f32 %v410, %v418
    %v423 = vmul.f32 %v413, %v419
    %v424 = vmul.f32 %v416, %v420
    %v425 = vsub.f32 2.0, %v421
    %v426 = vsub.f32 2.0, %v422
    %v427 = vsub.f32 2.0, %v423
    %v428 = vsub.f32 2.0, %v424
    %v429 = vmul.f32 %v417, %v425
    %v430 = vmul.f32 %v418, %v426
    %v431 = vmul.f32 %v419, %v427
    %v432 = vmul.f32 %v420, %v428
    %v434 = vsel %vm380, %v398, 0
    %436 = vmatprep.subr.mxu0 0.0
    %437 = vmatpush1.msra.mxu0 0.0
    %438 = vmatprep.subr.mxu0 0.0
    %439 = vmatpush1.msra.mxu0 0.0
    %440 = vmatprep.subr.mxu0 0.0
    %441 = vmatpush1.msra.mxu0 0.0
    %442 = vmatprep.subr.mxu0 0.0
    %443 = vmatpush1.msra.mxu0 0.0
    %444 = vmatprep.subr.mxu0 0.0
    %445 = vmatpush1.msra.mxu0 0.0
    %446 = vmatprep.subr.mxu0 0.0
    %447 = vmatpush1.msra.mxu0 0.0
    %448 = vmatprep.subr.mxu0 0.0
    %449 = vmatpush1.msra.mxu0 0.0
    %450 = vmatprep.subr.mxu0 0.0
    %451 = vmatpush1.msra.mxu0 0.0
    %452 = vmatprep.subr.mxu0 0.0
    %453 = vmatpush1.msra.mxu0 0.0
    %454 = vmatprep.subr.mxu0 0.0
    %455 = vmatpush1.msra.mxu0 0.0
    %456 = vmatprep.subr.mxu0 0.0
    %457 = vmatpush1.msra.mxu0 0.0
    %458 = vmatprep.subr.mxu0 0.0
    %459 = vmatpush1.msra.mxu0 0.0
    %460 = vmatprep.subr.mxu0 0.0
    %461 = vmatpush1.msra.mxu0 0.0
    %462 = vmatprep.subr.mxu0 0.0
    %463 = vmatpush1.msra.mxu0 0.0
    %464 = vmatprep.subr.mxu0 0.0
    %465 = vmatpush1.msra.mxu0 0.0
    %466 = vmatprep.subr.mxu0 0.0
    %467 = vmatpush1.msra.mxu0 %v71
    %468 = vmatprep.subr.mxu0 0.0
    %469 = vmatpush2.msra.mxu0 0.0
    %470 = vmatprep.subr.mxu0 0.0
    %471 = vmatpush2.msra.mxu0 0.0
    %472 = vmatprep.subr.mxu0 0.0
    %473 = vmatpush2.msra.mxu0 0.0
    %474 = vmatprep.subr.mxu0 0.0
    %475 = vmatpush2.msra.mxu0 0.0
    %476 = vmatprep.subr.mxu0 0.0
    %477 = vmatpush2.msra.mxu0 0.0
    %478 = vmatprep.subr.mxu0 0.0
    %479 = vmatpush2.msra.mxu0 0.0
    %480 = vmatprep.subr.mxu0 0.0
    %481 = vmatpush2.msra.mxu0 0.0
    %482 = vmatprep.subr.mxu0 0.0
    %483 = vmatpush2.msra.mxu0 0.0
    %484 = vmatprep.subr.mxu0 0.0
    %485 = vmatpush2.msra.mxu0 0.0
    %486 = vmatprep.subr.mxu0 0.0
    %487 = vmatpush2.msra.mxu0 0.0
    %488 = vmatprep.subr.mxu0 0.0
    %489 = vmatpush2.msra.mxu0 0.0
    %490 = vmatprep.subr.mxu0 0.0
    %491 = vmatpush2.msra.mxu0 0.0
    %492 = vmatprep.subr.mxu0 0.0
    %493 = vmatpush2.msra.mxu0 0.0
    %494 = vmatprep.subr.mxu0 0.0
    %495 = vmatpush2.msra.mxu0 0.0
    %496 = vmatprep.subr.mxu0 0.0
    %497 = vmatpush2.msra.mxu0 0.0
    %498 = vmatprep.subr.mxu0 0.0
    %499 = vmatpush2.msra.mxu0 0.0
    %500 = vmatprep.mubr.f32.mxu0 0.0
    %501 = vmatmul.mubr.f32.gmra.mxu0 %v434
    %v502 = vpop.f32.mrf.mxu0
    %v503 = vadd.f32 0.0, %v502
    %v504 = vpop.f32.mrf.mxu0
    %505 = vdwg.mxu0
    %v507 = vsel %vm380, %v400, 0
    %509 = vmatprep.subr.mxu0 0.0
    %510 = vmatpush1.msra.mxu0 0.0
    %511 = vmatprep.subr.mxu0 0.0
    %512 = vmatpush1.msra.mxu0 0.0
    %513 = vmatprep.subr.mxu0 0.0
    %514 = vmatpush1.msra.mxu0 0.0
    %515 = vmatprep.subr.mxu0 0.0
    %516 = vmatpush1.msra.mxu0 0.0
    %517 = vmatprep.subr.mxu0 0.0
    %518 = vmatpush1.msra.mxu0 0.0
    %519 = vmatprep.subr.mxu0 0.0
    %520 = vmatpush1.msra.mxu0 0.0
    %521 = vmatprep.subr.mxu0 0.0
    %522 = vmatpush1.msra.mxu0 0.0
    %523 = vmatprep.subr.mxu0 0.0
    %524 = vmatpush1.msra.mxu0 0.0
    %525 = vmatprep.subr.mxu0 0.0
    %526 = vmatpush1.msra.mxu0 0.0
    %527 = vmatprep.subr.mxu0 0.0
    %528 = vmatpush1.msra.mxu0 0.0
    %529 = vmatprep.subr.mxu0 0.0
    %530 = vmatpush1.msra.mxu0 0.0
    %531 = vmatprep.subr.mxu0 0.0
    %532 = vmatpush1.msra.mxu0 0.0
    %533 = vmatprep.subr.mxu0 0.0
    %534 = vmatpush1.msra.mxu0 0.0
    %535 = vmatprep.subr.mxu0 0.0
    %536 = vmatpush1.msra.mxu0 0.0
    %537 = vmatprep.subr.mxu0 0.0
    %538 = vmatpush1.msra.mxu0 0.0
    %539 = vmatprep.subr.mxu0 0.0
    %540 = vmatpush1.msra.mxu0 %v72
    %541 = vmatprep.subr.mxu0 0.0
    %542 = vmatpush2.msra.mxu0 0.0
    %543 = vmatprep.subr.mxu0 0.0
    %544 = vmatpush2.msra.mxu0 0.0
    %545 = vmatprep.subr.mxu0 0.0
    %546 = vmatpush2.msra.mxu0 0.0
    %547 = vmatprep.subr.mxu0 0.0
    %548 = vmatpush2.msra.mxu0 0.0
    %549 = vmatprep.subr.mxu0 0.0
    %550 = vmatpush2.msra.mxu0 0.0
    %551 = vmatprep.subr.mxu0 0.0
    %552 = vmatpush2.msra.mxu0 0.0
    %553 = vmatprep.subr.mxu0 0.0
    %554 = vmatpush2.msra.mxu0 0.0
    %555 = vmatprep.subr.mxu0 0.0
    %556 = vmatpush2.msra.mxu0 0.0
    %557 = vmatprep.subr.mxu0 0.0
    %558 = vmatpush2.msra.mxu0 0.0
    %559 = vmatprep.subr.mxu0 0.0
    %560 = vmatpush2.msra.mxu0 0.0
    %561 = vmatprep.subr.mxu0 0.0
    %562 = vmatpush2.msra.mxu0 0.0
    %563 = vmatprep.subr.mxu0 0.0
    %564 = vmatpush2.msra.mxu0 0.0
    %565 = vmatprep.subr.mxu0 0.0
    %566 = vmatpush2.msra.mxu0 0.0
    %567 = vmatprep.subr.mxu0 0.0
    %568 = vmatpush2.msra.mxu0 0.0
    %569 = vmatprep.subr.mxu0 0.0
    %570 = vmatpush2.msra.mxu0 0.0
    %571 = vmatprep.subr.mxu0 0.0
    %572 = vmatpush2.msra.mxu0 0.0
    %573 = vmatprep.mubr.f32.mxu0 0.0
    %574 = vmatmul.mubr.f32.gmra.mxu0 %v507
    %v575 = vpop.f32.mrf.mxu0
    %v576 = vadd.f32 0.0, %v575
    %v577 = vpop.f32.mrf.mxu0
    %578 = vdwg.mxu0
    %v580 = vsel %vm380, %v402, 0
    %582 = vmatprep.subr.mxu0 0.0
    %583 = vmatpush1.msra.mxu0 0.0
    %584 = vmatprep.subr.mxu0 0.0
    %585 = vmatpush1.msra.mxu0 0.0
    %586 = vmatprep.subr.mxu0 0.0
    %587 = vmatpush1.msra.mxu0 0.0
    %588 = vmatprep.subr.mxu0 0.0
    %589 = vmatpush1.msra.mxu0 0.0
    %590 = vmatprep.subr.mxu0 0.0
    %591 = vmatpush1.msra.mxu0 0.0
    %592 = vmatprep.subr.mxu0 0.0
    %593 = vmatpush1.msra.mxu0 0.0
    %594 = vmatprep.subr.mxu0 0.0
    %595 = vmatpush1.msra.mxu0 0.0
    %596 = vmatprep.subr.mxu0 0.0
    %597 = vmatpush1.msra.mxu0 0.0
    %598 = vmatprep.subr.mxu0 0.0
    %599 = vmatpush1.msra.mxu0 0.0
    %600 = vmatprep.subr.mxu0 0.0
    %601 = vmatpush1.msra.mxu0 0.0
    %602 = vmatprep.subr.mxu0 0.0
    %603 = vmatpush1.msra.mxu0 0.0
    %604 = vmatprep.subr.mxu0 0.0
    %605 = vmatpush1.msra.mxu0 0.0
    %606 = vmatprep.subr.mxu0 0.0
    %607 = vmatpush1.msra.mxu0 0.0
    %608 = vmatprep.subr.mxu0 0.0
    %609 = vmatpush1.msra.mxu0 0.0
    %610 = vmatprep.subr.mxu0 0.0
    %611 = vmatpush1.msra.mxu0 0.0
    %612 = vmatprep.subr.mxu0 0.0
    %613 = vmatpush1.msra.mxu0 %v73
    %614 = vmatprep.subr.mxu0 0.0
    %615 = vmatpush2.msra.mxu0 0.0
    %616 = vmatprep.subr.mxu0 0.0
    %617 = vmatpush2.msra.mxu0 0.0
    %618 = vmatprep.subr.mxu0 0.0
    %619 = vmatpush2.msra.mxu0 0.0
    %620 = vmatprep.subr.mxu0 0.0
    %621 = vmatpush2.msra.mxu0 0.0
    %622 = vmatprep.subr.mxu0 0.0
    %623 = vmatpush2.msra.mxu0 0.0
    %624 = vmatprep.subr.mxu0 0.0
    %625 = vmatpush2.msra.mxu0 0.0
    %626 = vmatprep.subr.mxu0 0.0
    %627 = vmatpush2.msra.mxu0 0.0
    %628 = vmatprep.subr.mxu0 0.0
    %629 = vmatpush2.msra.mxu0 0.0
    %630 = vmatprep.subr.mxu0 0.0
    %631 = vmatpush2.msra.mxu0 0.0
    %632 = vmatprep.subr.mxu0 0.0
    %633 = vmatpush2.msra.mxu0 0.0
    %634 = vmatprep.subr.mxu0 0.0
    %635 = vmatpush2.msra.mxu0 0.0
    %636 = vmatprep.subr.mxu0 0.0
    %637 = vmatpush2.msra.mxu0 0.0
    %638 = vmatprep.subr.mxu0 0.0
    %639 = vmatpush2.msra.mxu0 0.0
    %640 = vmatprep.subr.mxu0 0.0
    %641 = vmatpush2.msra.mxu0 0.0
    %642 = vmatprep.subr.mxu0 0.0
    %643 = vmatpush2.msra.mxu0 0.0
    %644 = vmatprep.subr.mxu0 0.0
    %645 = vmatpush2.msra.mxu0 0.0
    %646 = vmatprep.mubr.f32.mxu0 0.0
    %647 = vmatmul.mubr.f32.gmra.mxu0 %v580
    %v648 = vpop.f32.mrf.mxu0
    %v649 = vadd.f32 0.0, %v648
    %v650 = vpop.f32.mrf.mxu0
    %651 = vdwg.mxu0
    %v653 = vsel %vm380, %v404, 0
    %655 = vmatprep.subr.mxu0 0.0
    %656 = vmatpush1.msra.mxu0 0.0
    %657 = vmatprep.subr.mxu0 0.0
    %658 = vmatpush1.msra.mxu0 0.0
    %659 = vmatprep.subr.mxu0 0.0
    %660 = vmatpush1.msra.mxu0 0.0
    %661 = vmatprep.subr.mxu0 0.0
    %662 = vmatpush1.msra.mxu0 0.0
    %663 = vmatprep.subr.mxu0 0.0
    %664 = vmatpush1.msra.mxu0 0.0
    %665 = vmatprep.subr.mxu0 0.0
    %666 = vmatpush1.msra.mxu0 0.0
    %667 = vmatprep.subr.mxu0 0.0
    %668 = vmatpush1.msra.mxu0 0.0
    %669 = vmatprep.subr.mxu0 0.0
    %670 = vmatpush1.msra.mxu0 0.0
    %671 = vmatprep.subr.mxu0 0.0
    %672 = vmatpush1.msra.mxu0 0.0
    %673 = vmatprep.subr.mxu0 0.0
    %674 = vmatpush1.msra.mxu0 0.0
    %675 = vmatprep.subr.mxu0 0.0
    %676 = vmatpush1.msra.mxu0 0.0
    %677 = vmatprep.subr.mxu0 0.0
    %678 = vmatpush1.msra.mxu0 0.0
    %679 = vmatprep.subr.mxu0 0.0
    %680 = vmatpush1.msra.mxu0 0.0
    %681 = vmatprep.subr.mxu0 0.0
    %682 = vmatpush1.msra.mxu0 0.0
    %683 = vmatprep.subr.mxu0 0.0
    %684 = vmatpush1.msra.mxu0 0.0
    %685 = vmatprep.subr.mxu0 0.0
    %686 = vmatpush1.msra.mxu0 %v74
    %687 = vmatprep.subr.mxu0 0.0
    %688 = vmatpush2.msra.mxu0 0.0
    %689 = vmatprep.subr.mxu0 0.0
    %690 = vmatpush2.msra.mxu0 0.0
    %691 = vmatprep.subr.mxu0 0.0
    %692 = vmatpush2.msra.mxu0 0.0
    %693 = vmatprep.subr.mxu0 0.0
    %694 = vmatpush2.msra.mxu0 0.0
    %695 = vmatprep.subr.mxu0 0.0
    %696 = vmatpush2.msra.mxu0 0.0
    %697 = vmatprep.subr.mxu0 0.0
    %698 = vmatpush2.msra.mxu0 0.0
    %699 = vmatprep.subr.mxu0 0.0
    %700 = vmatpush2.msra.mxu0 0.0
    %701 = vmatprep.subr.mxu0 0.0
    %702 = vmatpush2.msra.mxu0 0.0
    %703 = vmatprep.subr.mxu0 0.0
    %704 = vmatpush2.msra.mxu0 0.0
    %705 = vmatprep.subr.mxu0 0.0
    %706 = vmatpush2.msra.mxu0 0.0
    %707 = vmatprep.subr.mxu0 0.0
    %708 = vmatpush2.msra.mxu0 0.0
    %709 = vmatprep.subr.mxu0 0.0
    %710 = vmatpush2.msra.mxu0 0.0
    %711 = vmatprep.subr.mxu0 0.0
    %712 = vmatpush2.msra.mxu0 0.0
    %713 = vmatprep.subr.mxu0 0.0
    %714 = vmatpush2.msra.mxu0 0.0
    %715 = vmatprep.subr.mxu0 0.0
    %716 = vmatpush2.msra.mxu0 0.0
    %717 = vmatprep.subr.mxu0 0.0
    %718 = vmatpush2.msra.mxu0 0.0
    %719 = vmatprep.mubr.f32.mxu0 0.0
    %720 = vmatmul.mubr.f32.gmra.mxu0 %v653
    %v721 = vpop.f32.mrf.mxu0
    %v722 = vadd.f32 0.0, %v721
    %v723 = vpop.f32.mrf.mxu0
    %724 = vdwg.mxu0
    %v725 = vmul.f32 %v503, %v429
    %v726 = vmul.f32 %v576, %v430
    %v727 = vmul.f32 %v649, %v431
    %v728 = vmul.f32 %v722, %v432
    %v729 = vmul.f32 %v398, %v429
    %v730 = vmul.f32 %v400, %v430
    %v731 = vmul.f32 %v402, %v431
    %v732 = vmul.f32 %v404, %v432
    %733 = vst.msk [vmem:[#allocation9] sm:$0xff] %vm380, %v729
    %734 = vst.msk [vmem:[#allocation9 + $0x8] sm:$0xff] %vm380, %v730
    %735 = vst.msk [vmem:[#allocation9 + $0x10] sm:$0xff] %vm380, %v731
    %736 = vst.msk [vmem:[#allocation9 + $0x18] sm:$0xff] %vm380, %v732
    %737 = vst.msk [vmem:[#allocation8] sm:$0xff] %vm75, %v725
    %738 = vst.msk [vmem:[#allocation8 + $0x8] sm:$0xff] %vm75, %v726
    %739 = vst.msk [vmem:[#allocation8 + $0x10] sm:$0xff] %vm75, %v727
    %740 = vst.msk [vmem:[#allocation8 + $0x18] sm:$0xff] %vm75, %v728
    // Predicated region
    $region26: #{tpu_custom_call.1} parent=1 // pred_check
      _
    $region27: #{tpu_custom_call.1} parent=1 // pred_check_branch
      %742 = sbr.rel (0) target = $region29
    $region28: #{tpu_custom_call.1} parent=1 // pred_region
      %s744 = ssub.s32 512, 512
      %745 = vsyncadd [#allocation4], %s744
      %s746 = sshll.u32 [#allocation8], 4
      %s747 = int_to_ptr.vmem [resolvable:$true] %s746
      %752 = dma.vmem_to_hbm [thread:$0]  %s747, 512, %s3, [#allocation4], 128, 128, 8
    $region29: #{tpu_custom_call.1} parent=1 // pred_fallthru
      _
    // Predicated region
    $region30: #{tpu_custom_call.1} parent=1 // pred_check
      _
    $region31: #{tpu_custom_call.1} parent=1 // pred_check_branch
      %754 = sbr.rel (0) target = $region33
    $region32: #{tpu_custom_call.1} parent=1 // pred_region
      %s756 = ssub.s32 512, 512
      %757 = vsyncadd [#allocation10], %s756
      %s758 = sshll.u32 [#allocation9], 4
      %s759 = int_to_ptr.vmem [resolvable:$true] %s758
      %764 = dma.vmem_to_hbm [thread:$0]  %s759, 512, %s4, [#allocation10], 128, 128, 8
    $region33: #{tpu_custom_call.1} parent=1 // pred_fallthru
      _
    // Predicated region
    $region34: #{tpu_custom_call.1} parent=1 // pred_check
      _
    $region35: #{tpu_custom_call.1} parent=1 // pred_check_branch
      %766 = sbr.rel (0) target = $region37
    $region36: #{tpu_custom_call.1} parent=1 // pred_region
      %767 = dma.done [#allocation4], 512
    $region37: #{tpu_custom_call.1} parent=1 // pred_fallthru
      _
    // Predicated region
    $region38: #{tpu_custom_call.1} parent=1 // pred_check
      _
    $region39: #{tpu_custom_call.1} parent=1 // pred_check_branch
      %769 = sbr.rel (0) target = $region41
    $region40: #{tpu_custom_call.1} parent=1 // pred_region
      %770 = dma.done [#allocation10], 512
    $region41: #{tpu_custom_call.1} parent=1 // pred_fallthru
      _
    %771 = vsyncpa [#allocation3], 1
    %772 = vsyncpa [#allocation6], 1
    %773 = vsyncpa [#allocation4], 1
    %774 = vsyncpa [#allocation10], 1

</llo_original>
